<compile_context>
chip_gen: v7x
topology: tpu7x:2x2x1
jax: 0.10.0
libtpu: 0.0.40
codegen_flags: <defaults>
</compile_context>

<pallas_src>
import functools

import jax
import jax.numpy as jnp
from jax import lax
from jax.experimental import pallas as pl
from jax.experimental.pallas import tpu as pltpu

_LANES = 128
_SUBLANES = 8
_DEFAULT_MAX_BLOCK_ROWS = 2048   # 2048 * 128 * 4 B = 1 MiB per input tile
_NEG = -3.0e38                   # Python float -> jaxpr literal (not a captured const)


def _cdiv(a: int, b: int) -> int:
    return -(-a // b)


def _round_up(a: int, b: int) -> int:
    return _cdiv(a, b) * b


def _online_update(x_ref, out_ref, m_slot, l_slot, logit_fn, tile, n_tiles, n_valid):
    """Streams one (block_rows, 128) tile into the (8, 128) online-logsumexp
    accumulators held at out_ref[0, m_slot] / out_ref[0, l_slot]."""
    br, lanes = x_ref.shape
    sub = br // _SUBLANES

    def _accumulate(logit3, valid3):
        # logit3: (sub, 8, 128). axis=0 reductions are vreg-wise elementwise
        # VPU ops; no cross-sublane/XLU work in the hot loop.
        tile_max = jnp.max(logit3, axis=0)                       # (8, 128)
        m_old = out_ref[0, m_slot]
        m_new = jnp.maximum(m_old, tile_max)
        p = jnp.exp(logit3 - m_new)                              # EUP
        if valid3 is not None:
            # Needed when an accumulator slot is fully masked: exp(_NEG-_NEG)=1.
            p = jnp.where(valid3, p, 0.0)
        out_ref[0, l_slot] = (out_ref[0, l_slot] * jnp.exp(m_old - m_new)
                              + jnp.sum(p, axis=0))
        out_ref[0, m_slot] = m_new

    is_last = tile == (n_tiles - 1)

    @pl.when(jnp.logical_not(is_last))
    def _full_tile():                 # fast path: every element is valid
        _accumulate(logit_fn(x_ref[...]).reshape(sub, _SUBLANES, lanes), None)

    @pl.when(is_last)
    def _partial_tile():              # masked path: runs once per input
        limit = n_valid - tile * (br * lanes)
        row = lax.broadcasted_iota(jnp.int32, (br, lanes), 0)
        lane = lax.broadcasted_iota(jnp.int32, (br, lanes), 1)
        valid = (row * lanes + lane) < limit
        logit = jnp.where(valid, logit_fn(x_ref[...]), _NEG)
        _accumulate(logit.reshape(sub, _SUBLANES, lanes),
                    valid.reshape(sub, _SUBLANES, lanes))


def _circle_loss_kernel(sp_ref, sn_ref, out_ref, *, m, gamma,
                        n_p, n_n, nt_p, nt_n, inner):
    c = pl.program_id(0)      # chunk ("parallel": one per TensorCore on v7x)
    j = pl.program_id(1)      # streaming tile index within the chunk
    tile = c * inner + j

    @pl.when(j == 0)
    def _init():
        neg = jnp.full_like(out_ref[0, 0], _NEG)
        zero = jnp.zeros_like(neg)
        out_ref[0, 0] = neg   # running max,     positives
        out_ref[0, 1] = zero  # running sum-exp, positives
        out_ref[0, 2] = neg   # running max,     negatives
        out_ref[0, 3] = zero  # running sum-exp, negatives

    # logit_p = -clamp_min(-sp + 1 + m, 0) * (sp - (1 - m)) * gamma
    def _logit_p(sp):
        return -jnp.maximum(-sp + (1.0 + m), 0.0) * (sp - (1.0 - m)) * gamma

    # logit_n = clamp_min(sn + m, 0) * (sn - m) * gamma
    def _logit_n(sn):
        return jnp.maximum(sn + m, 0.0) * (sn - m) * gamma

    # Dead-tile gating: once an input's tiles are exhausted, skip all its work.
    @pl.when(tile < nt_p)
    def _():
        _online_update(sp_ref, out_ref, 0, 1, _logit_p, tile, nt_p, n_p)

    @pl.when(tile < nt_n)
    def _():
        _online_update(sn_ref, out_ref, 2, 3, _logit_n, tile, nt_n, n_n)


def _layout(n: int, max_block_rows: int):
    rows = _round_up(max(1, _cdiv(n, _LANES)), _SUBLANES)            # padded rows
    block_rows = min(_round_up(max(1, int(max_block_rows)), _SUBLANES), rows)
    n_tiles = _cdiv(rows, block_rows)
    return rows, block_rows, n_tiles


def circle_loss(sp: jax.Array, sn: jax.Array, *, m: float, gamma: float,
                max_block_rows: int = _DEFAULT_MAX_BLOCK_ROWS) -> jax.Array:
    """Pallas TPU implementation of CircleLoss.forward.

    sp: (Np,) positive-pair similarities, sn: (Nn,) negative-pair similarities.
    (torch's .detach() only affects gradients; the forward math is identical.)
    """
    n_p, n_n = int(sp.shape[0]), int(sn.shape[0])
    assert n_p > 0 and n_n > 0, "empty sp/sn is undefined (matches torch.logsumexp)"

    rows_p, br_p, nt_p = _layout(n_p, max_block_rows)
    rows_n, br_n, nt_n = _layout(n_n, max_block_rows)
    max_tiles = max(nt_p, nt_n)
    n_chunks = min(2, max_tiles)          # 2 TCs on v7x; free elsewhere
    inner = _cdiv(max_tiles, n_chunks)

    sp2 = jnp.pad(sp.astype(jnp.float32).reshape(-1),
                  (0, rows_p * _LANES - n_p)).reshape(rows_p, _LANES)
    sn2 = jnp.pad(sn.astype(jnp.float32).reshape(-1),
                  (0, rows_n * _LANES - n_n)).reshape(rows_n, _LANES)

    kernel = functools.partial(
        _circle_loss_kernel, m=float(m), gamma=float(gamma),
        n_p=n_p, n_n=n_n, nt_p=nt_p, nt_n=nt_n, inner=inner)

    cost = pl.CostEstimate(
        flops=int(12 * (n_p + n_n) + 4096),
        transcendentals=int(2 * (n_p + n_n) + 16),
        bytes_accessed=int(4 * (rows_p + rows_n) * _LANES
                           + 4 * n_chunks * 4 * _SUBLANES * _LANES),
    )

    parts = pl.pallas_call(
        kernel,
        out_shape=jax.ShapeDtypeStruct((n_chunks, 4, _SUBLANES, _LANES), jnp.float32),
        grid_spec=pltpu.PrefetchScalarGridSpec(
            num_scalar_prefetch=0,
            grid=(n_chunks, inner),
            in_specs=[
                pl.BlockSpec(
                    (br_p, _LANES),
                    lambda c, j, _inner=inner, _nt=nt_p:
                        (jnp.minimum(c * _inner + j, _nt - 1), 0)),
                pl.BlockSpec(
                    (br_n, _LANES),
                    lambda c, j, _inner=inner, _nt=nt_n:
                        (jnp.minimum(c * _inner + j, _nt - 1), 0)),
            ],
            out_specs=pl.BlockSpec((1, 4, _SUBLANES, _LANES),
                                   lambda c, j: (c, 0, 0, 0)),
        ),
        compiler_params=pltpu.CompilerParams(
            dimension_semantics=("parallel", "arbitrary"),
            vmem_limit_bytes=32 * 1024 * 1024),
        cost_estimate=cost,
    )(sp2, sn2)

    # Tiny JAX epilogue: fold the per-chunk (running max, running sum) partials
    # into the two logsumexps, then a numerically stable softplus.
    def _lse(m_acc, l_acc):
        big = jnp.max(m_acc)
        s = jnp.sum(l_acc * jnp.exp(m_acc - big))
        return big + jnp.log(s)

    z = _lse(parts[:, 0], parts[:, 1]) + _lse(parts[:, 2], parts[:, 3])
    return jnp.logaddexp(0.0, z)          # softplus(z)


def _circle_loss_ref(sp, sn, *, m, gamma):
    """Pure-JAX reference mirroring the PyTorch module, for verification."""
    ap = jnp.maximum(-sp + 1.0 + m, 0.0)
    an = jnp.maximum(sn + m, 0.0)
    logit_p = -ap * (sp - (1.0 - m)) * gamma
    logit_n = an * (sn - m) * gamma
    z = (jax.scipy.special.logsumexp(logit_n, axis=0)
         + jax.scipy.special.logsumexp(logit_p, axis=0))
    return jax.nn.softplus(z)


if __name__ == "__main__":
    key = jax.random.PRNGKey(0)
    m, gamma = 0.25, 80.0
    k1, k2, k3, k4, k5, k6 = jax.random.split(key, 6)

    # Case 1: tiny shapes (typical in-batch pair mining); single masked tile.
    sp = jax.random.uniform(k1, (8,), jnp.float32, minval=-1.0, maxval=1.0)
    sn = jax.random.uniform(k2, (32,), jnp.float32, minval=-1.0, maxval=1.0)
    out = jax.block_until_ready(circle_loss(sp, sn, m=m, gamma=gamma))
    ref = _circle_loss_ref(sp, sn, m=m, gamma=gamma)
    assert jnp.allclose(out, ref, rtol=2e-5, atol=1e-4), (out, ref)

    # Case 2: overhanging last block + 2-chunk split + dead-tile gating.
    sp_b = jax.random.uniform(k3, (100,), jnp.float32, minval=-1.0, maxval=1.0)
    sn_b = jax.random.uniform(k4, (3000,), jnp.float32, minval=-1.0, maxval=1.0)
    out_b = jax.block_until_ready(
        circle_loss(sp_b, sn_b, m=m, gamma=gamma, max_block_rows=16))
    ref_b = _circle_loss_ref(sp_b, sn_b, m=m, gamma=gamma)
    assert jnp.allclose(out_b, ref_b, rtol=2e-5, atol=1e-4), (out_b, ref_b)

    # Case 3: multiple streaming tiles per chunk, unequal tile counts.
    sp_c = jax.random.uniform(k5, (100,), jnp.float32, minval=-1.0, maxval=1.0)
    sn_c = jax.random.uniform(k6, (4000,), jnp.float32, minval=-1.0, maxval=1.0)
    out_c = jax.block_until_ready(
        circle_loss(sp_c, sn_c, m=m, gamma=gamma, max_block_rows=8))
    ref_c = _circle_loss_ref(sp_c, sn_c, m=m, gamma=gamma)
    assert jnp.allclose(out_c, ref_c, rtol=2e-5, atol=1e-4), (out_c, ref_c)

    print("KERNEL_OK")
</pallas_src>

<mosaic_0001>
module attributes {stable_mosaic.version = 11 : i64} {
  func.func @_circle_loss_kernel(%arg0: i32, %arg1: i32, %arg2: memref<8x128xf32, #tpu.memory_space<vmem>>, %arg3: memref<8x128xf32, #tpu.memory_space<vmem>>, %arg4: memref<1x4x8x128xf32, #tpu.memory_space<vmem>>) attributes {dimension_semantics = [#tpu.dimension_semantics<parallel>, #tpu.dimension_semantics<arbitrary>], iteration_bounds = array<i64: 1, 1>, scalar_prefetch = 0 : i64, scratch_operands = 0 : i64, tpu.core_type = #tpu.core_type<tc>, window_params = [{transform_indices = @transform_0, window_bounds = array<i64: 8, 128>}, {transform_indices = @transform_1, window_bounds = array<i64: 8, 128>}, {transform_indices = @transform_2, window_bounds = array<i64: 1, 4, 8, 128>}]} {
    %c1_i32 = arith.constant 1 : i32
    %0 = arith.muli %arg0, %c1_i32 : i32
    %1 = arith.addi %0, %arg1 : i32
    %c0_i32 = arith.constant 0 : i32
    %2 = arith.cmpi eq, %arg1, %c0_i32 : i32
    %3 = arith.extui %2 : i1 to i32
    %c0_i32_0 = arith.constant 0 : i32
    %4 = arith.cmpi ne, %3, %c0_i32_0 : i32
    scf.if %4 {
      %cst = arith.constant -3.000000e+38 : f32
      %11 = vector.broadcast %cst : f32 to vector<8x128xf32>
      %cst_5 = arith.constant 0.000000e+00 : f32
      %12 = vector.broadcast %cst_5 : f32 to vector<8x128xf32>
      %c0 = arith.constant 0 : index
      %c0_6 = arith.constant 0 : index
      %c0_7 = arith.constant 0 : index
      %c0_8 = arith.constant 0 : index
      %13 = vector.load %arg4[%c0, %c0_6, %c0_7, %c0_8] : memref<1x4x8x128xf32, #tpu.memory_space<vmem>>, vector<1x1x8x128xf32>
      %14 = vector.shape_cast %13 : vector<1x1x8x128xf32> to vector<8x128xf32>
      %15 = vector.shape_cast %11 : vector<8x128xf32> to vector<1x1x8x128xf32>
      tpu.vector_store %arg4[%c0, %c0_6, %c0_7, %c0_8], %15 {strides = array<i32>} : memref<1x4x8x128xf32, #tpu.memory_space<vmem>>, vector<1x1x8x128xf32>,
      %c0_9 = arith.constant 0 : index
      %c1 = arith.constant 1 : index
      %c0_10 = arith.constant 0 : index
      %c0_11 = arith.constant 0 : index
      %16 = vector.load %arg4[%c0_9, %c1, %c0_10, %c0_11] : memref<1x4x8x128xf32, #tpu.memory_space<vmem>>, vector<1x1x8x128xf32>
      %17 = vector.shape_cast %16 : vector<1x1x8x128xf32> to vector<8x128xf32>
      %18 = vector.shape_cast %12 : vector<8x128xf32> to vector<1x1x8x128xf32>
      tpu.vector_store %arg4[%c0_9, %c1, %c0_10, %c0_11], %18 {strides = array<i32>} : memref<1x4x8x128xf32, #tpu.memory_space<vmem>>, vector<1x1x8x128xf32>,
      %c0_12 = arith.constant 0 : index
      %c2 = arith.constant 2 : index
      %c0_13 = arith.constant 0 : index
      %c0_14 = arith.constant 0 : index
      %19 = vector.load %arg4[%c0_12, %c2, %c0_13, %c0_14] : memref<1x4x8x128xf32, #tpu.memory_space<vmem>>, vector<1x1x8x128xf32>
      %20 = vector.shape_cast %19 : vector<1x1x8x128xf32> to vector<8x128xf32>
      %21 = vector.shape_cast %11 : vector<8x128xf32> to vector<1x1x8x128xf32>
      tpu.vector_store %arg4[%c0_12, %c2, %c0_13, %c0_14], %21 {strides = array<i32>} : memref<1x4x8x128xf32, #tpu.memory_space<vmem>>, vector<1x1x8x128xf32>,
      %c0_15 = arith.constant 0 : index
      %c3 = arith.constant 3 : index
      %c0_16 = arith.constant 0 : index
      %c0_17 = arith.constant 0 : index
      %22 = vector.load %arg4[%c0_15, %c3, %c0_16, %c0_17] : memref<1x4x8x128xf32, #tpu.memory_space<vmem>>, vector<1x1x8x128xf32>
      %23 = vector.shape_cast %22 : vector<1x1x8x128xf32> to vector<8x128xf32>
      %24 = vector.shape_cast %12 : vector<8x128xf32> to vector<1x1x8x128xf32>
      tpu.vector_store %arg4[%c0_15, %c3, %c0_16, %c0_17], %24 {strides = array<i32>} : memref<1x4x8x128xf32, #tpu.memory_space<vmem>>, vector<1x1x8x128xf32>,
    } else {
    }
    %c1_i32_1 = arith.constant 1 : i32
    %5 = arith.cmpi slt, %1, %c1_i32_1 : i32
    %6 = arith.extui %5 : i1 to i32
    %c0_i32_2 = arith.constant 0 : i32
    %7 = arith.cmpi ne, %6, %c0_i32_2 : i32
    scf.if %7 {
      %c0_i32_5 = arith.constant 0 : i32
      %11 = arith.cmpi eq, %1, %c0_i32_5 : i32
      %true = arith.constant true
      %12 = arith.xori %11, %true : i1
      %13 = arith.extui %12 : i1 to i32
      %c0_i32_6 = arith.constant 0 : i32
      %14 = arith.cmpi ne, %13, %c0_i32_6 : i32
      scf.if %14 {
        %c0 = arith.constant 0 : index
        %c0_8 = arith.constant 0 : index
        %17 = vector.load %arg2[%c0, %c0_8] : memref<8x128xf32, #tpu.memory_space<vmem>>, vector<8x128xf32>
        %cst = arith.constant 0.000000e+00 : f32
        %18 = vector.broadcast %cst : f32 to vector<8x128xf32>
        %19 = arith.subf %18, %17 : vector<8x128xf32>
        %cst_9 = arith.constant 1.250000e+00 : f32
        %20 = vector.broadcast %cst_9 : f32 to vector<8x128xf32>
        %21 = arith.addf %19, %20 : vector<8x128xf32>
        %cst_10 = arith.constant 0.000000e+00 : f32
        %22 = vector.broadcast %cst_10 : f32 to vector<8x128xf32>
        %23 = arith.maximumf %21, %22 : vector<8x128xf32>
        %cst_11 = arith.constant 0.000000e+00 : f32
        %24 = vector.broadcast %cst_11 : f32 to vector<8x128xf32>
        %25 = arith.subf %24, %23 : vector<8x128xf32>
        %cst_12 = arith.constant 7.500000e-01 : f32
        %26 = vector.broadcast %cst_12 : f32 to vector<8x128xf32>
        %27 = arith.subf %17, %26 : vector<8x128xf32>
        %28 = arith.mulf %25, %27 : vector<8x128xf32>
        %cst_13 = arith.constant 8.000000e+01 : f32
        %29 = vector.broadcast %cst_13 : f32 to vector<8x128xf32>
        %30 = arith.mulf %28, %29 : vector<8x128xf32>
        %31 = vector.shape_cast %30 : vector<8x128xf32> to vector<1x8x128xf32>
        %cst_14 = arith.constant dense<0xFF800000> : vector<8x128xf32>
        %32 = vector.multi_reduction <maximumf>, %31, %cst_14 [0] : vector<1x8x128xf32> to vector<8x128xf32>
        %c0_15 = arith.constant 0 : index
        %c0_16 = arith.constant 0 : index
        %c0_17 = arith.constant 0 : index
        %c0_18 = arith.constant 0 : index
        %33 = vector.load %arg4[%c0_15, %c0_16, %c0_17, %c0_18] : memref<1x4x8x128xf32, #tpu.memory_space<vmem>>, vector<1x1x8x128xf32>
        %34 = vector.shape_cast %33 : vector<1x1x8x128xf32> to vector<8x128xf32>
        %35 = arith.maximumf %34, %32 : vector<8x128xf32>
        %36 = vector.shape_cast %35 : vector<8x128xf32> to vector<1x8x128xf32>
        %37 = arith.subf %31, %36 : vector<1x8x128xf32>
        %38 = math.exp %37 : vector<1x8x128xf32>
        %c0_19 = arith.constant 0 : index
        %c1 = arith.constant 1 : index
        %c0_20 = arith.constant 0 : index
        %c0_21 = arith.constant 0 : index
        %39 = vector.load %arg4[%c0_19, %c1, %c0_20, %c0_21] : memref<1x4x8x128xf32, #tpu.memory_space<vmem>>, vector<1x1x8x128xf32>
        %40 = vector.shape_cast %39 : vector<1x1x8x128xf32> to vector<8x128xf32>
        %41 = arith.subf %34, %35 : vector<8x128xf32>
        %42 = math.exp %41 : vector<8x128xf32>
        %43 = arith.mulf %40, %42 : vector<8x128xf32>
        %cst_22 = arith.constant dense<0.000000e+00> : vector<8x128xf32>
        %44 = vector.multi_reduction <add>, %38, %cst_22 [0] : vector<1x8x128xf32> to vector<8x128xf32>
        %45 = arith.addf %43, %44 : vector<8x128xf32>
        %c0_23 = arith.constant 0 : index
        %c1_24 = arith.constant 1 : index
        %c0_25 = arith.constant 0 : index
        %c0_26 = arith.constant 0 : index
        %46 = vector.load %arg4[%c0_23, %c1_24, %c0_25, %c0_26] : memref<1x4x8x128xf32, #tpu.memory_space<vmem>>, vector<1x1x8x128xf32>
        %47 = vector.shape_cast %46 : vector<1x1x8x128xf32> to vector<8x128xf32>
        %48 = vector.shape_cast %45 : vector<8x128xf32> to vector<1x1x8x128xf32>
        tpu.vector_store %arg4[%c0_23, %c1_24, %c0_25, %c0_26], %48 {strides = array<i32>} : memref<1x4x8x128xf32, #tpu.memory_space<vmem>>, vector<1x1x8x128xf32>,
        %c0_27 = arith.constant 0 : index
        %c0_28 = arith.constant 0 : index
        %c0_29 = arith.constant 0 : index
        %c0_30 = arith.constant 0 : index
        %49 = vector.load %arg4[%c0_27, %c0_28, %c0_29, %c0_30] : memref<1x4x8x128xf32, #tpu.memory_space<vmem>>, vector<1x1x8x128xf32>
        %50 = vector.shape_cast %49 : vector<1x1x8x128xf32> to vector<8x128xf32>
        %51 = vector.shape_cast %35 : vector<8x128xf32> to vector<1x1x8x128xf32>
        tpu.vector_store %arg4[%c0_27, %c0_28, %c0_29, %c0_30], %51 {strides = array<i32>} : memref<1x4x8x128xf32, #tpu.memory_space<vmem>>, vector<1x1x8x128xf32>,
      } else {
      }
      %15 = arith.extui %11 : i1 to i32
      %c0_i32_7 = arith.constant 0 : i32
      %16 = arith.cmpi ne, %15, %c0_i32_7 : i32
      scf.if %16 {
        %c1024_i32 = arith.constant 1024 : i32
        %17 = arith.muli %1, %c1024_i32 : i32
        %c8_i32 = arith.constant 8 : i32
        %18 = arith.subi %c8_i32, %17 : i32
        %19 = tpu.iota {dimensions = array<i32: 0>} : vector<8x128xi32>
        %20 = tpu.iota {dimensions = array<i32: 1>} : vector<8x128xi32>
        %c128_i32 = arith.constant 128 : i32
        %21 = vector.broadcast %c128_i32 : i32 to vector<8x128xi32>
        %22 = arith.muli %19, %21 : vector<8x128xi32>
        %23 = arith.addi %22, %20 : vector<8x128xi32>
        %24 = vector.broadcast %18 : i32 to vector<8x128xi32>
        %25 = arith.cmpi slt, %23, %24 : vector<8x128xi32>
        %c0 = arith.constant 0 : index
        %c0_8 = arith.constant 0 : index
        %26 = vector.load %arg2[%c0, %c0_8] : memref<8x128xf32, #tpu.memory_space<vmem>>, vector<8x128xf32>
        %cst = arith.constant 0.000000e+00 : f32
        %27 = vector.broadcast %cst : f32 to vector<8x128xf32>
        %28 = arith.subf %27, %26 : vector<8x128xf32>
        %cst_9 = arith.constant 1.250000e+00 : f32
        %29 = vector.broadcast %cst_9 : f32 to vector<8x128xf32>
        %30 = arith.addf %28, %29 : vector<8x128xf32>
        %cst_10 = arith.constant 0.000000e+00 : f32
        %31 = vector.broadcast %cst_10 : f32 to vector<8x128xf32>
        %32 = arith.maximumf %30, %31 : vector<8x128xf32>
        %cst_11 = arith.constant 0.000000e+00 : f32
        %33 = vector.broadcast %cst_11 : f32 to vector<8x128xf32>
        %34 = arith.subf %33, %32 : vector<8x128xf32>
        %cst_12 = arith.constant 7.500000e-01 : f32
        %35 = vector.broadcast %cst_12 : f32 to vector<8x128xf32>
        %36 = arith.subf %26, %35 : vector<8x128xf32>
        %37 = arith.mulf %34, %36 : vector<8x128xf32>
        %cst_13 = arith.constant 8.000000e+01 : f32
        %38 = vector.broadcast %cst_13 : f32 to vector<8x128xf32>
        %39 = arith.mulf %37, %38 : vector<8x128xf32>
        %cst_14 = arith.constant -3.000000e+38 : f32
        %40 = vector.broadcast %cst_14 : f32 to vector<8x128xf32>
        %41 = arith.select %25, %39, %40 : vector<8x128xi1>, vector<8x128xf32>
        %42 = vector.shape_cast %41 : vector<8x128xf32> to vector<1x8x128xf32>
        %43 = vector.shape_cast %25 : vector<8x128xi1> to vector<1x8x128xi1>
        %cst_15 = arith.constant dense<0xFF800000> : vector<8x128xf32>
        %44 = vector.multi_reduction <maximumf>, %42, %cst_15 [0] : vector<1x8x128xf32> to vector<8x128xf32>
        %c0_16 = arith.constant 0 : index
        %c0_17 = arith.constant 0 : index
        %c0_18 = arith.constant 0 : index
        %c0_19 = arith.constant 0 : index
        %45 = vector.load %arg4[%c0_16, %c0_17, %c0_18, %c0_19] : memref<1x4x8x128xf32, #tpu.memory_space<vmem>>, vector<1x1x8x128xf32>
        %46 = vector.shape_cast %45 : vector<1x1x8x128xf32> to vector<8x128xf32>
        %47 = arith.maximumf %46, %44 : vector<8x128xf32>
        %48 = vector.shape_cast %47 : vector<8x128xf32> to vector<1x8x128xf32>
        %49 = arith.subf %42, %48 : vector<1x8x128xf32>
        %50 = math.exp %49 : vector<1x8x128xf32>
        %cst_20 = arith.constant 0.000000e+00 : f32
        %51 = vector.broadcast %cst_20 : f32 to vector<1x8x128xf32>
        %52 = arith.select %43, %50, %51 : vector<1x8x128xi1>, vector<1x8x128xf32>
        %c0_21 = arith.constant 0 : index
        %c1 = arith.constant 1 : index
        %c0_22 = arith.constant 0 : index
        %c0_23 = arith.constant 0 : index
        %53 = vector.load %arg4[%c0_21, %c1, %c0_22, %c0_23] : memref<1x4x8x128xf32, #tpu.memory_space<vmem>>, vector<1x1x8x128xf32>
        %54 = vector.shape_cast %53 : vector<1x1x8x128xf32> to vector<8x128xf32>
        %55 = arith.subf %46, %47 : vector<8x128xf32>
        %56 = math.exp %55 : vector<8x128xf32>
        %57 = arith.mulf %54, %56 : vector<8x128xf32>
        %cst_24 = arith.constant dense<0.000000e+00> : vector<8x128xf32>
        %58 = vector.multi_reduction <add>, %52, %cst_24 [0] : vector<1x8x128xf32> to vector<8x128xf32>
        %59 = arith.addf %57, %58 : vector<8x128xf32>
        %c0_25 = arith.constant 0 : index
        %c1_26 = arith.constant 1 : index
        %c0_27 = arith.constant 0 : index
        %c0_28 = arith.constant 0 : index
        %60 = vector.load %arg4[%c0_25, %c1_26, %c0_27, %c0_28] : memref<1x4x8x128xf32, #tpu.memory_space<vmem>>, vector<1x1x8x128xf32>
        %61 = vector.shape_cast %60 : vector<1x1x8x128xf32> to vector<8x128xf32>
        %62 = vector.shape_cast %59 : vector<8x128xf32> to vector<1x1x8x128xf32>
        tpu.vector_store %arg4[%c0_25, %c1_26, %c0_27, %c0_28], %62 {strides = array<i32>} : memref<1x4x8x128xf32, #tpu.memory_space<vmem>>, vector<1x1x8x128xf32>,
        %c0_29 = arith.constant 0 : index
        %c0_30 = arith.constant 0 : index
        %c0_31 = arith.constant 0 : index
        %c0_32 = arith.constant 0 : index
        %63 = vector.load %arg4[%c0_29, %c0_30, %c0_31, %c0_32] : memref<1x4x8x128xf32, #tpu.memory_space<vmem>>, vector<1x1x8x128xf32>
        %64 = vector.shape_cast %63 : vector<1x1x8x128xf32> to vector<8x128xf32>
        %65 = vector.shape_cast %47 : vector<8x128xf32> to vector<1x1x8x128xf32>
        tpu.vector_store %arg4[%c0_29, %c0_30, %c0_31, %c0_32], %65 {strides = array<i32>} : memref<1x4x8x128xf32, #tpu.memory_space<vmem>>, vector<1x1x8x128xf32>,
      } else {
      }
    } else {
    }
    %c1_i32_3 = arith.constant 1 : i32
    %8 = arith.cmpi slt, %1, %c1_i32_3 : i32
    %9 = arith.extui %8 : i1 to i32
    %c0_i32_4 = arith.constant 0 : i32
    %10 = arith.cmpi ne, %9, %c0_i32_4 : i32
    scf.if %10 {
      %c0_i32_5 = arith.constant 0 : i32
      %11 = arith.cmpi eq, %1, %c0_i32_5 : i32
      %true = arith.constant true
      %12 = arith.xori %11, %true : i1
      %13 = arith.extui %12 : i1 to i32
      %c0_i32_6 = arith.constant 0 : i32
      %14 = arith.cmpi ne, %13, %c0_i32_6 : i32
      scf.if %14 {
        %c0 = arith.constant 0 : index
        %c0_8 = arith.constant 0 : index
        %17 = vector.load %arg3[%c0, %c0_8] : memref<8x128xf32, #tpu.memory_space<vmem>>, vector<8x128xf32>
        %cst = arith.constant 2.500000e-01 : f32
        %18 = vector.broadcast %cst : f32 to vector<8x128xf32>
        %19 = arith.addf %17, %18 : vector<8x128xf32>
        %cst_9 = arith.constant 0.000000e+00 : f32
        %20 = vector.broadcast %cst_9 : f32 to vector<8x128xf32>
        %21 = arith.maximumf %19, %20 : vector<8x128xf32>
        %cst_10 = arith.constant 2.500000e-01 : f32
        %22 = vector.broadcast %cst_10 : f32 to vector<8x128xf32>
        %23 = arith.subf %17, %22 : vector<8x128xf32>
        %24 = arith.mulf %21, %23 : vector<8x128xf32>
        %cst_11 = arith.constant 8.000000e+01 : f32
        %25 = vector.broadcast %cst_11 : f32 to vector<8x128xf32>
        %26 = arith.mulf %24, %25 : vector<8x128xf32>
        %27 = vector.shape_cast %26 : vector<8x128xf32> to vector<1x8x128xf32>
        %cst_12 = arith.constant dense<0xFF800000> : vector<8x128xf32>
        %28 = vector.multi_reduction <maximumf>, %27, %cst_12 [0] : vector<1x8x128xf32> to vector<8x128xf32>
        %c0_13 = arith.constant 0 : index
        %c2 = arith.constant 2 : index
        %c0_14 = arith.constant 0 : index
        %c0_15 = arith.constant 0 : index
        %29 = vector.load %arg4[%c0_13, %c2, %c0_14, %c0_15] : memref<1x4x8x128xf32, #tpu.memory_space<vmem>>, vector<1x1x8x128xf32>
        %30 = vector.shape_cast %29 : vector<1x1x8x128xf32> to vector<8x128xf32>
        %31 = arith.maximumf %30, %28 : vector<8x128xf32>
        %32 = vector.shape_cast %31 : vector<8x128xf32> to vector<1x8x128xf32>
        %33 = arith.subf %27, %32 : vector<1x8x128xf32>
        %34 = math.exp %33 : vector<1x8x128xf32>
        %c0_16 = arith.constant 0 : index
        %c3 = arith.constant 3 : index
        %c0_17 = arith.constant 0 : index
        %c0_18 = arith.constant 0 : index
        %35 = vector.load %arg4[%c0_16, %c3, %c0_17, %c0_18] : memref<1x4x8x128xf32, #tpu.memory_space<vmem>>, vector<1x1x8x128xf32>
        %36 = vector.shape_cast %35 : vector<1x1x8x128xf32> to vector<8x128xf32>
        %37 = arith.subf %30, %31 : vector<8x128xf32>
        %38 = math.exp %37 : vector<8x128xf32>
        %39 = arith.mulf %36, %38 : vector<8x128xf32>
        %cst_19 = arith.constant dense<0.000000e+00> : vector<8x128xf32>
        %40 = vector.multi_reduction <add>, %34, %cst_19 [0] : vector<1x8x128xf32> to vector<8x128xf32>
        %41 = arith.addf %39, %40 : vector<8x128xf32>
        %c0_20 = arith.constant 0 : index
        %c3_21 = arith.constant 3 : index
        %c0_22 = arith.constant 0 : index
        %c0_23 = arith.constant 0 : index
        %42 = vector.load %arg4[%c0_20, %c3_21, %c0_22, %c0_23] : memref<1x4x8x128xf32, #tpu.memory_space<vmem>>, vector<1x1x8x128xf32>
        %43 = vector.shape_cast %42 : vector<1x1x8x128xf32> to vector<8x128xf32>
        %44 = vector.shape_cast %41 : vector<8x128xf32> to vector<1x1x8x128xf32>
        tpu.vector_store %arg4[%c0_20, %c3_21, %c0_22, %c0_23], %44 {strides = array<i32>} : memref<1x4x8x128xf32, #tpu.memory_space<vmem>>, vector<1x1x8x128xf32>,
        %c0_24 = arith.constant 0 : index
        %c2_25 = arith.constant 2 : index
        %c0_26 = arith.constant 0 : index
        %c0_27 = arith.constant 0 : index
        %45 = vector.load %arg4[%c0_24, %c2_25, %c0_26, %c0_27] : memref<1x4x8x128xf32, #tpu.memory_space<vmem>>, vector<1x1x8x128xf32>
        %46 = vector.shape_cast %45 : vector<1x1x8x128xf32> to vector<8x128xf32>
        %47 = vector.shape_cast %31 : vector<8x128xf32> to vector<1x1x8x128xf32>
        tpu.vector_store %arg4[%c0_24, %c2_25, %c0_26, %c0_27], %47 {strides = array<i32>} : memref<1x4x8x128xf32, #tpu.memory_space<vmem>>, vector<1x1x8x128xf32>,
      } else {
      }
      %15 = arith.extui %11 : i1 to i32
      %c0_i32_7 = arith.constant 0 : i32
      %16 = arith.cmpi ne, %15, %c0_i32_7 : i32
      scf.if %16 {
        %c1024_i32 = arith.constant 1024 : i32
        %17 = arith.muli %1, %c1024_i32 : i32
        %c32_i32 = arith.constant 32 : i32
        %18 = arith.subi %c32_i32, %17 : i32
        %19 = tpu.iota {dimensions = array<i32: 0>} : vector<8x128xi32>
        %20 = tpu.iota {dimensions = array<i32: 1>} : vector<8x128xi32>
        %c128_i32 = arith.constant 128 : i32
        %21 = vector.broadcast %c128_i32 : i32 to vector<8x128xi32>
        %22 = arith.muli %19, %21 : vector<8x128xi32>
        %23 = arith.addi %22, %20 : vector<8x128xi32>
        %24 = vector.broadcast %18 : i32 to vector<8x128xi32>
        %25 = arith.cmpi slt, %23, %24 : vector<8x128xi32>
        %c0 = arith.constant 0 : index
        %c0_8 = arith.constant 0 : index
        %26 = vector.load %arg3[%c0, %c0_8] : memref<8x128xf32, #tpu.memory_space<vmem>>, vector<8x128xf32>
        %cst = arith.constant 2.500000e-01 : f32
        %27 = vector.broadcast %cst : f32 to vector<8x128xf32>
        %28 = arith.addf %26, %27 : vector<8x128xf32>
        %cst_9 = arith.constant 0.000000e+00 : f32
        %29 = vector.broadcast %cst_9 : f32 to vector<8x128xf32>
        %30 = arith.maximumf %28, %29 : vector<8x128xf32>
        %cst_10 = arith.constant 2.500000e-01 : f32
        %31 = vector.broadcast %cst_10 : f32 to vector<8x128xf32>
        %32 = arith.subf %26, %31 : vector<8x128xf32>
        %33 = arith.mulf %30, %32 : vector<8x128xf32>
        %cst_11 = arith.constant 8.000000e+01 : f32
        %34 = vector.broadcast %cst_11 : f32 to vector<8x128xf32>
        %35 = arith.mulf %33, %34 : vector<8x128xf32>
        %cst_12 = arith.constant -3.000000e+38 : f32
        %36 = vector.broadcast %cst_12 : f32 to vector<8x128xf32>
        %37 = arith.select %25, %35, %36 : vector<8x128xi1>, vector<8x128xf32>
        %38 = vector.shape_cast %37 : vector<8x128xf32> to vector<1x8x128xf32>
        %39 = vector.shape_cast %25 : vector<8x128xi1> to vector<1x8x128xi1>
        %cst_13 = arith.constant dense<0xFF800000> : vector<8x128xf32>
        %40 = vector.multi_reduction <maximumf>, %38, %cst_13 [0] : vector<1x8x128xf32> to vector<8x128xf32>
        %c0_14 = arith.constant 0 : index
        %c2 = arith.constant 2 : index
        %c0_15 = arith.constant 0 : index
        %c0_16 = arith.constant 0 : index
        %41 = vector.load %arg4[%c0_14, %c2, %c0_15, %c0_16] : memref<1x4x8x128xf32, #tpu.memory_space<vmem>>, vector<1x1x8x128xf32>
        %42 = vector.shape_cast %41 : vector<1x1x8x128xf32> to vector<8x128xf32>
        %43 = arith.maximumf %42, %40 : vector<8x128xf32>
        %44 = vector.shape_cast %43 : vector<8x128xf32> to vector<1x8x128xf32>
        %45 = arith.subf %38, %44 : vector<1x8x128xf32>
        %46 = math.exp %45 : vector<1x8x128xf32>
        %cst_17 = arith.constant 0.000000e+00 : f32
        %47 = vector.broadcast %cst_17 : f32 to vector<1x8x128xf32>
        %48 = arith.select %39, %46, %47 : vector<1x8x128xi1>, vector<1x8x128xf32>
        %c0_18 = arith.constant 0 : index
        %c3 = arith.constant 3 : index
        %c0_19 = arith.constant 0 : index
        %c0_20 = arith.constant 0 : index
        %49 = vector.load %arg4[%c0_18, %c3, %c0_19, %c0_20] : memref<1x4x8x128xf32, #tpu.memory_space<vmem>>, vector<1x1x8x128xf32>
        %50 = vector.shape_cast %49 : vector<1x1x8x128xf32> to vector<8x128xf32>
        %51 = arith.subf %42, %43 : vector<8x128xf32>
        %52 = math.exp %51 : vector<8x128xf32>
        %53 = arith.mulf %50, %52 : vector<8x128xf32>
        %cst_21 = arith.constant dense<0.000000e+00> : vector<8x128xf32>
        %54 = vector.multi_reduction <add>, %48, %cst_21 [0] : vector<1x8x128xf32> to vector<8x128xf32>
        %55 = arith.addf %53, %54 : vector<8x128xf32>
        %c0_22 = arith.constant 0 : index
        %c3_23 = arith.constant 3 : index
        %c0_24 = arith.constant 0 : index
        %c0_25 = arith.constant 0 : index
        %56 = vector.load %arg4[%c0_22, %c3_23, %c0_24, %c0_25] : memref<1x4x8x128xf32, #tpu.memory_space<vmem>>, vector<1x1x8x128xf32>
        %57 = vector.shape_cast %56 : vector<1x1x8x128xf32> to vector<8x128xf32>
        %58 = vector.shape_cast %55 : vector<8x128xf32> to vector<1x1x8x128xf32>
        tpu.vector_store %arg4[%c0_22, %c3_23, %c0_24, %c0_25], %58 {strides = array<i32>} : memref<1x4x8x128xf32, #tpu.memory_space<vmem>>, vector<1x1x8x128xf32>,
        %c0_26 = arith.constant 0 : index
        %c2_27 = arith.constant 2 : index
        %c0_28 = arith.constant 0 : index
        %c0_29 = arith.constant 0 : index
        %59 = vector.load %arg4[%c0_26, %c2_27, %c0_28, %c0_29] : memref<1x4x8x128xf32, #tpu.memory_space<vmem>>, vector<1x1x8x128xf32>
        %60 = vector.shape_cast %59 : vector<1x1x8x128xf32> to vector<8x128xf32>
        %61 = vector.shape_cast %43 : vector<8x128xf32> to vector<1x1x8x128xf32>
        tpu.vector_store %arg4[%c0_26, %c2_27, %c0_28, %c0_29], %61 {strides = array<i32>} : memref<1x4x8x128xf32, #tpu.memory_space<vmem>>, vector<1x1x8x128xf32>,
      } else {
      }
    } else {
    }
    return
  }
  func.func @transform_0(%arg0: i32, %arg1: i32) -> (i32, i32) {
    %c1_i32 = arith.constant 1 : i32
    %0 = arith.muli %arg0, %c1_i32 : i32
    %1 = arith.addi %0, %arg1 : i32
    %c0_i32 = arith.constant 0 : i32
    %2 = arith.minsi %1, %c0_i32 : i32
    %c0_i32_0 = arith.constant 0 : i32
    %c0_i32_1 = arith.constant 0 : i32
    return %2, %c0_i32_0 : i32, i32
  }
  func.func @transform_1(%arg0: i32, %arg1: i32) -> (i32, i32) {
    %c1_i32 = arith.constant 1 : i32
    %0 = arith.muli %arg0, %c1_i32 : i32
    %1 = arith.addi %0, %arg1 : i32
    %c0_i32 = arith.constant 0 : i32
    %2 = arith.minsi %1, %c0_i32 : i32
    %c0_i32_0 = arith.constant 0 : i32
    %c0_i32_1 = arith.constant 0 : i32
    return %2, %c0_i32_0 : i32, i32
  }
  func.func @transform_2(%arg0: i32, %arg1: i32) -> (i32, i32, i32, i32) {
    %c0_i32 = arith.constant 0 : i32
    %c0_i32_0 = arith.constant 0 : i32
    %c0_i32_1 = arith.constant 0 : i32
    %c0_i32_2 = arith.constant 0 : i32
    return %arg0, %c0_i32, %c0_i32_0, %c0_i32_1 : i32, i32, i32, i32
  }
}

</mosaic_0001>

<llo_original>
// kernel: tpu_custom_call.1
$region0: #{tpu_custom_call.1}
  #allocation0 [shape = 'u32[]', space=smem, size = 0x4, offset = 0x4, fixed_abs, tag = 'smem constant byte address 0x4 - core index']
  #allocation1 [shape = 'u32[144,128]{1,0:T(1,128)}', space=vmem, size = 0x12000, scoped, tag = 'internal scratch']
  %s0 = inlined_call_operand.hbm [shape: f32[8,128], index: 0, kind: input, shape index: {}]
  %s1 = inlined_call_operand.hbm [shape: f32[8,128], index: 1, kind: input, shape index: {}]
  %s2 = inlined_call_operand.hbm [shape: f32[1,4,8,128], index: 2, kind: output, shape index: {}]
  %s3 = sld [smem:[#allocation0]]
  $region50: #{tpu_custom_call.1} parent=0
    _
  %s5 = ssub.s32 1, %s3
  %s6 = scalar_select 0, %s5, %s3
  $region1: #{tpu_custom_call.1} parent=0
    #allocation2 [shape = 'u8[4096]{0}', space=vmem, size = 0x1000, scoped, tag = 'input window, operand 0, single buffered']
    #allocation3 [shape = 's32[1]{0}', space=sflag, size = 0x4, scoped, tag = 'scoped memory for tpu_custom_call.1']
    #allocation4 [shape = 's32[1]{0}', space=sflag, size = 0x4, scoped, tag = 'scoped memory for tpu_custom_call.1']
    #allocation5 [shape = 'u8[4096]{0}', space=vmem, size = 0x1000, scoped, tag = 'input window, operand 1, single buffered']
    #allocation6 [shape = 's32[1]{0}', space=sflag, size = 0x4, scoped, tag = 'scoped memory for tpu_custom_call.1']
    #allocation7 [shape = 'u8[16384]{0}', space=vmem, size = 0x4000, scoped, tag = 'output window, operand 0, single buffered']
    %7 = vsyncpa [#allocation3], 0
    %8 = vsyncpa [#allocation6], 0
    %9 = vsyncpa [#allocation4], 0
    // Predicated region
    $region2: #{tpu_custom_call.1} parent=1 // pred_check
      _
    $region3: #{tpu_custom_call.1} parent=1 // pred_check_branch
      %11 = sbr.rel (0) target = $region5
    $region4: #{tpu_custom_call.1} parent=1 // pred_region
      %s12 = sadd.s32 0, 0
      %p13 = scmp.lt.s32.totalorder %s12, 0
      %s14 = scalar_select %p13, %s12, 0
      %s16 = ssub.s32 128, 128
      %17 = vsyncadd [#allocation3], %s16
      %s18 = smul.addr %s14, 128
      %s19 = scalar_lea.hbm %s0, %s18
      %s21 = sshll.u32 [#allocation2], 4
      %s22 = int_to_ptr.vmem [resolvable:$true] %s21
      %24 = dma.hbm_to_vmem [thread:$0]  %s19, 128, %s22, [#allocation3]
    $region5: #{tpu_custom_call.1} parent=1 // pred_fallthru
      _
    // Predicated region
    $region6: #{tpu_custom_call.1} parent=1 // pred_check
      _
    $region7: #{tpu_custom_call.1} parent=1 // pred_check_branch
      %26 = sbr.rel (0) target = $region9
    $region8: #{tpu_custom_call.1} parent=1 // pred_region
      %s27 = sadd.s32 0, 0
      %p28 = scmp.lt.s32.totalorder %s27, 0
      %s29 = scalar_select %p28, %s27, 0
      %s31 = ssub.s32 128, 128
      %32 = vsyncadd [#allocation6], %s31
      %s33 = smul.addr %s29, 128
      %s34 = scalar_lea.hbm %s1, %s33
      %s36 = sshll.u32 [#allocation5], 4
      %s37 = int_to_ptr.vmem [resolvable:$true] %s36
      %39 = dma.hbm_to_vmem [thread:$0]  %s34, 128, %s37, [#allocation6]
    $region9: #{tpu_custom_call.1} parent=1 // pred_fallthru
      _
    // Predicated region
    $region10: #{tpu_custom_call.1} parent=1 // pred_check
      _
    $region11: #{tpu_custom_call.1} parent=1 // pred_check_branch
      %41 = sbr.rel (0) target = $region13
    $region12: #{tpu_custom_call.1} parent=1 // pred_region
      %42 = dma.done [#allocation3], 128
    $region13: #{tpu_custom_call.1} parent=1 // pred_fallthru
      _
    // Predicated region
    $region14: #{tpu_custom_call.1} parent=1 // pred_check
      _
    $region15: #{tpu_custom_call.1} parent=1 // pred_check_branch
      %44 = sbr.rel (0) target = $region17
    $region16: #{tpu_custom_call.1} parent=1 // pred_region
      %45 = dma.done [#allocation6], 128
    $region17: #{tpu_custom_call.1} parent=1 // pred_fallthru
      _
    %s46 = sadd.s32 0, 0
    %p47 = scmp.lt.s32.totalorder %s46, 0
    %s48 = scalar_select %p47, %s46, 0
    %s49 = sadd.s32 0, 0
    %p50 = scmp.lt.s32.totalorder %s49, 0
    %s51 = scalar_select %p50, %s49, 0
    %s52 = sadd.s32 0, 0
    %p53 = scmp.eq.s32.totalorder 0, 0
    // Predicated region
    $region18: #{tpu_custom_call.1} parent=1 // pred_check
      %p54 = pneg %p53
    $region19: #{tpu_custom_call.1} parent=1 // pred_check_branch
      %56 = sbr.rel (%p54) target = $region21
    $region20: #{tpu_custom_call.1} parent=1 // pred_region
      %57 = vst [vmem:[#allocation7] sm:$0xff] -3e+38
      %s58 = scalar_lea.vmem [#allocation7], 8
      %59 = vst [vmem:[%s58] sm:$0xff] 0.0
      %s60 = scalar_lea.vmem [#allocation7], 16
      %61 = vst [vmem:[%s60] sm:$0xff] -3e+38
      %s62 = scalar_lea.vmem [#allocation7], 24
      %63 = vst [vmem:[%s62] sm:$0xff] 0.0
    $region21: #{tpu_custom_call.1} parent=1 // pred_fallthru
      _
    %p64 = scmp.lt.s32.totalorder %s52, 1
    // Predicated region
    $region22: #{tpu_custom_call.1} parent=1 // pred_check
      %p65 = pneg %p64
    $region23: #{tpu_custom_call.1} parent=1 // pred_check_branch
      %67 = sbr.rel (%p65) target = $region25
    $region24: #{tpu_custom_call.1} parent=1 // pred_region
      %p68 = scmp.eq.s32.totalorder %s52, 0
      %p69 = scmp.ne.s32.totalorder %s52, 0
      // Predicated region
      $region26: #{tpu_custom_call.1} parent=24 // pred_check
        %p70 = pneg %p69
      $region27: #{tpu_custom_call.1} parent=24 // pred_check_branch
        %72 = sbr.rel (%p70) target = $region29
      $region28: #{tpu_custom_call.1} parent=24 // pred_region
        %v73 = vld [vmem:[#allocation2] sm:$0xff]
        %v74 = vsub.f32 0.0, %v73
        %v75 = vadd.f32 %v74, 1.25
        %v76 = vmax.f32 %v75, 0.0
        %v77 = vsub.f32 0.0, %v76
        %v78 = vsub.f32 %v73, 0.75
        %v79 = vmul.f32 %v77, %v78
        %v80 = vmul.f32 %v79, 80.0
        %v81 = vld [vmem:[#allocation7] sm:$0xff]
        %v82 = vmax.f32 %v81, %v80
        %v83 = vsub.f32 %v80, %v82
        %v84 = vmul.f32 %v83, 1.442695
        %v85 = vpow.pop %v84
        %s86 = scalar_lea.vmem [#allocation7], 8
        %v87 = vld [vmem:[%s86] sm:$0xff]
        %v88 = vsub.f32 %v81, %v82
        %v89 = vmul.f32 %v88, 1.442695
        %v90 = vpow.pop %v89
        %v91 = vmul.f32 %v87, %v90
        %v92 = vadd.f32 %v85, 0.0
        %v93 = vadd.f32 %v91, %v92
        %94 = vst [vmem:[%s86] sm:$0xff] %v93
        %95 = vst [vmem:[#allocation7] sm:$0xff] %v82
      $region29: #{tpu_custom_call.1} parent=24 // pred_fallthru
        _
      // Predicated region
      $region30: #{tpu_custom_call.1} parent=24 // pred_check
        %p96 = pneg %p68
      $region31: #{tpu_custom_call.1} parent=24 // pred_check_branch
        %98 = sbr.rel (%p96) target = $region33
      $region32: #{tpu_custom_call.1} parent=24 // pred_region
        %s99 = smul.u32 %s52, 1024
        %s100 = ssub.s32 8, %s99
        %v101 = vlaneseq
        %v102 = vshrl.u32 %v101, 7
        %v103 = vlaneseq
        %v104 = vand.u32 %v103, 127
        %v105 = vmul.u32 %v102, 128
        %v106 = vadd.s32 %v105, %v104
        %v107 = vstv %s100
        %vm108 = vcmp.lt.s32.totalorder %v106, %v107
        %v109 = vld [vmem:[#allocation2] sm:$0xff]
        %v110 = vsub.f32 0.0, %v109
        %v111 = vadd.f32 %v110, 1.25
        %v112 = vmax.f32 %v111, 0.0
        %v113 = vsub.f32 0.0, %v112
        %v114 = vsub.f32 %v109, 0.75
        %v115 = vmul.f32 %v113, %v114
        %v116 = vmul.f32 %v115, 80.0
        %v117 = vsel %vm108, %v116, -3e+38
        %v118 = vld [vmem:[#allocation7] sm:$0xff]
        %v119 = vmax.f32 %v118, %v117
        %v120 = vsub.f32 %v117, %v119
        %v121 = vmul.f32 %v120, 1.442695
        %v122 = vpow.pop %v121
        %v123 = vsel %vm108, %v122, 0.0
        %s124 = scalar_lea.vmem [#allocation7], 8
        %v125 = vld [vmem:[%s124] sm:$0xff]
        %v126 = vsub.f32 %v118, %v119
        %v127 = vmul.f32 %v126, 1.442695
        %v128 = vpow.pop %v127
        %v129 = vmul.f32 %v125, %v128
        %v130 = vadd.f32 %v123, 0.0
        %v131 = vadd.f32 %v129, %v130
        %132 = vst [vmem:[%s124] sm:$0xff] %v131
        %133 = vst [vmem:[#allocation7] sm:$0xff] %v119
      $region33: #{tpu_custom_call.1} parent=24 // pred_fallthru
        _
      // Predicated region
      $region34: #{tpu_custom_call.1} parent=24 // pred_check
        %p134 = pneg %p69
      $region35: #{tpu_custom_call.1} parent=24 // pred_check_branch
        %136 = sbr.rel (%p134) target = $region37
      $region36: #{tpu_custom_call.1} parent=24 // pred_region
        %v137 = vld [vmem:[#allocation5] sm:$0xff]
        %v138 = vadd.f32 %v137, 0.25
        %v139 = vmax.f32 %v138, 0.0
        %v140 = vsub.f32 %v137, 0.25
        %v141 = vmul.f32 %v139, %v140
        %v142 = vmul.f32 %v141, 80.0
        %s143 = scalar_lea.vmem [#allocation7], 16
        %v144 = vld [vmem:[%s143] sm:$0xff]
        %v145 = vmax.f32 %v144, %v142
        %v146 = vsub.f32 %v142, %v145
        %v147 = vmul.f32 %v146, 1.442695
        %v148 = vpow.pop %v147
        %s149 = scalar_lea.vmem [#allocation7], 24
        %v150 = vld [vmem:[%s149] sm:$0xff]
        %v151 = vsub.f32 %v144, %v145
        %v152 = vmul.f32 %v151, 1.442695
        %v153 = vpow.pop %v152
        %v154 = vmul.f32 %v150, %v153
        %v155 = vadd.f32 %v148, 0.0
        %v156 = vadd.f32 %v154, %v155
        %157 = vst [vmem:[%s149] sm:$0xff] %v156
        %158 = vst [vmem:[%s143] sm:$0xff] %v145
      $region37: #{tpu_custom_call.1} parent=24 // pred_fallthru
        _
      // Predicated region
      $region38: #{tpu_custom_call.1} parent=24 // pred_check
        %p159 = pneg %p68
      $region39: #{tpu_custom_call.1} parent=24 // pred_check_branch
        %161 = sbr.rel (%p159) target = $region41
      $region40: #{tpu_custom_call.1} parent=24 // pred_region
        %s162 = smul.u32 %s52, 1024
        %s163 = ssub.s32 32, %s162
        %v164 = vlaneseq
        %v165 = vshrl.u32 %v164, 7
        %v166 = vlaneseq
        %v167 = vand.u32 %v166, 127
        %v168 = vmul.u32 %v165, 128
        %v169 = vadd.s32 %v168, %v167
        %v170 = vstv %s163
        %vm171 = vcmp.lt.s32.totalorder %v169, %v170
        %v172 = vld [vmem:[#allocation5] sm:$0xff]
        %v173 = vadd.f32 %v172, 0.25
        %v174 = vmax.f32 %v173, 0.0
        %v175 = vsub.f32 %v172, 0.25
        %v176 = vmul.f32 %v174, %v175
        %v177 = vmul.f32 %v176, 80.0
        %v178 = vsel %vm171, %v177, -3e+38
        %s179 = scalar_lea.vmem [#allocation7], 16
        %v180 = vld [vmem:[%s179] sm:$0xff]
        %v181 = vmax.f32 %v180, %v178
        %v182 = vsub.f32 %v178, %v181
        %v183 = vmul.f32 %v182, 1.442695
        %v184 = vpow.pop %v183
        %v185 = vsel %vm171, %v184, 0.0
        %s186 = scalar_lea.vmem [#allocation7], 24
        %v187 = vld [vmem:[%s186] sm:$0xff]
        %v188 = vsub.f32 %v180, %v181
        %v189 = vmul.f32 %v188, 1.442695
        %v190 = vpow.pop %v189
        %v191 = vmul.f32 %v187, %v190
        %v192 = vadd.f32 %v185, 0.0
        %v193 = vadd.f32 %v191, %v192
        %194 = vst [vmem:[%s186] sm:$0xff] %v193
        %195 = vst [vmem:[%s179] sm:$0xff] %v181
      $region41: #{tpu_custom_call.1} parent=24 // pred_fallthru
        _
    $region25: #{tpu_custom_call.1} parent=1 // pred_fallthru
      _
    // Predicated region
    $region42: #{tpu_custom_call.1} parent=1 // pred_check
      _
    $region43: #{tpu_custom_call.1} parent=1 // pred_check_branch
      %197 = sbr.rel (0) target = $region45
    $region44: #{tpu_custom_call.1} parent=1 // pred_region
      %s199 = ssub.s32 512, 512
      %200 = vsyncadd [#allocation4], %s199
      %s201 = sshll.u32 [#allocation7], 4
      %s202 = int_to_ptr.vmem [resolvable:$true] %s201
      %207 = dma.vmem_to_hbm [thread:$0]  %s202, 512, %s2, [#allocation4], 128, 128, 8
    $region45: #{tpu_custom_call.1} parent=1 // pred_fallthru
      _
    // Predicated region
    $region46: #{tpu_custom_call.1} parent=1 // pred_check
      _
    $region47: #{tpu_custom_call.1} parent=1 // pred_check_branch
      %209 = sbr.rel (0) target = $region49
    $region48: #{tpu_custom_call.1} parent=1 // pred_region
      %210 = dma.done [#allocation4], 512
    $region49: #{tpu_custom_call.1} parent=1 // pred_fallthru
      _
    %211 = vsyncpa [#allocation3], 1
    %212 = vsyncpa [#allocation6], 1
    %213 = vsyncpa [#allocation4], 1

</llo_original>
